<compile_context>
chip_gen: v7x
topology: tpu7x:2x2x1
jax: 0.10.0
libtpu: 0.0.40
codegen_flags: <defaults>
</compile_context>

<pallas_src>
import jax
import jax.numpy as jnp
from jax.experimental import pallas as pl
from jax.experimental.pallas import tpu as pltpu

NUM = 2  # number of losses (matches AutomaticWeightedLoss(num=2))


def _awl_kernel(in_ref, out_ref):
    # in_ref: (NUM + 2,) f32 in SMEM = [p0, p1, loss1, loss2]
    # Splat each SMEM scalar into a (1,1) value; all arithmetic then runs on
    # the VPU/EUP (no scalar-unit float math, no cross-lane data movement).
    p0 = jnp.full((1, 1), in_ref[0], dtype=jnp.float32)
    p1 = jnp.full((1, 1), in_ref[1], dtype=jnp.float32)
    l1 = jnp.full((1, 1), in_ref[2], dtype=jnp.float32)
    l2 = jnp.full((1, 1), in_ref[3], dtype=jnp.float32)

    p0_sq = p0 * p0
    p1_sq = p1 * p1

    # Exact divide (VPU) + log (EUP); mirrors torch.log(1 + p**2) exactly.
    t0 = l1 * (0.5 / p0_sq) + jnp.log(1.0 + p0_sq)
    t1 = l2 * (0.5 / p1_sq) + jnp.log(1.0 + p1_sq)

    out_ref[...] = t0 + t1


def _awl_call(params, loss1, loss2):
    """params: (NUM,) f32; loss1/loss2: scalar f32. Returns scalar f32."""
    packed = jnp.concatenate([
        params.astype(jnp.float32).reshape(NUM),
        jnp.asarray(loss1, jnp.float32).reshape(1),
        jnp.asarray(loss2, jnp.float32).reshape(1),
    ])  # (NUM + 2,) -> single SMEM operand

    out = pl.pallas_call(
        _awl_kernel,
        out_shape=jax.ShapeDtypeStruct((1, 1), jnp.float32),
        in_specs=[pl.BlockSpec(memory_space=pltpu.SMEM)],
        out_specs=pl.BlockSpec(memory_space=pltpu.VMEM),
    )(packed)
    return out[0, 0]


automatic_weighted_loss = jax.jit(_awl_call)


if __name__ == "__main__":
    # Deterministic parameter init: torch.ones(num) -> jnp.ones(NUM)
    params = jnp.ones((NUM,), dtype=jnp.float32)

    # Deterministic example "loss" scalars.
    key = jax.random.PRNGKey(0)
    k1, k2 = jax.random.split(key)
    loss1 = jax.random.uniform(k1, (), jnp.float32, minval=0.1, maxval=2.0)
    loss2 = jax.random.uniform(k2, (), jnp.float32, minval=0.1, maxval=2.0)

    result = jax.block_until_ready(automatic_weighted_loss(params, loss1, loss2))

    # Reference check (plain JAX) mirroring the PyTorch math exactly.
    p = params
    expected = (0.5 / p[0] ** 2 * loss1 + jnp.log(1.0 + p[0] ** 2)
                + 0.5 / p[1] ** 2 * loss2 + jnp.log(1.0 + p[1] ** 2))
    assert jnp.allclose(result, expected, rtol=1e-5, atol=1e-6), (result, expected)

    print("KERNEL_OK")
</pallas_src>

<mosaic_0001>
module attributes {stable_mosaic.version = 11 : i64} {
  func.func @_awl_kernel(%arg0: memref<4xf32, #tpu.memory_space<smem>>, %arg1: memref<1x1xf32, #tpu.memory_space<vmem>>) attributes {dimension_semantics = [], scalar_prefetch = 0 : i64, scratch_operands = 0 : i64, tpu.core_type = #tpu.core_type<tc>} {
    %c0 = arith.constant 0 : index
    %0 = memref.load %arg0[%c0] : memref<4xf32, #tpu.memory_space<smem>>
    %1 = vector.broadcast %0 : f32 to vector<1x1xf32>
    %c1 = arith.constant 1 : index
    %2 = memref.load %arg0[%c1] : memref<4xf32, #tpu.memory_space<smem>>
    %3 = vector.broadcast %2 : f32 to vector<1x1xf32>
    %c2 = arith.constant 2 : index
    %4 = memref.load %arg0[%c2] : memref<4xf32, #tpu.memory_space<smem>>
    %5 = vector.broadcast %4 : f32 to vector<1x1xf32>
    %c3 = arith.constant 3 : index
    %6 = memref.load %arg0[%c3] : memref<4xf32, #tpu.memory_space<smem>>
    %7 = vector.broadcast %6 : f32 to vector<1x1xf32>
    %8 = arith.mulf %1, %1 : vector<1x1xf32>
    %9 = arith.mulf %3, %3 : vector<1x1xf32>
    %cst = arith.constant 5.000000e-01 : f32
    %10 = vector.broadcast %cst : f32 to vector<1x1xf32>
    %11 = arith.divf %10, %8 : vector<1x1xf32>
    %12 = arith.mulf %5, %11 : vector<1x1xf32>
    %cst_0 = arith.constant 1.000000e+00 : f32
    %13 = vector.broadcast %cst_0 : f32 to vector<1x1xf32>
    %14 = arith.addf %13, %8 : vector<1x1xf32>
    %15 = math.log %14 : vector<1x1xf32>
    %16 = arith.addf %12, %15 : vector<1x1xf32>
    %cst_1 = arith.constant 5.000000e-01 : f32
    %17 = vector.broadcast %cst_1 : f32 to vector<1x1xf32>
    %18 = arith.divf %17, %9 : vector<1x1xf32>
    %19 = arith.mulf %7, %18 : vector<1x1xf32>
    %cst_2 = arith.constant 1.000000e+00 : f32
    %20 = vector.broadcast %cst_2 : f32 to vector<1x1xf32>
    %21 = arith.addf %20, %9 : vector<1x1xf32>
    %22 = math.log %21 : vector<1x1xf32>
    %23 = arith.addf %19, %22 : vector<1x1xf32>
    %24 = arith.addf %16, %23 : vector<1x1xf32>
    %c0_3 = arith.constant 0 : index
    %c0_4 = arith.constant 0 : index
    %25 = vector.load %arg1[%c0_3, %c0_4] : memref<1x1xf32, #tpu.memory_space<vmem>>, vector<1x1xf32>
    tpu.vector_store %arg1[%c0_3, %c0_4], %24 {strides = array<i32>} : memref<1x1xf32, #tpu.memory_space<vmem>>, vector<1x1xf32>,
    return
  }
}

</mosaic_0001>

<llo_original>
// kernel: _awl_call.1
$region0: #{_awl_call.1}
  #allocation0 [shape = 'u32[]', space=smem, size = 0x4, offset = 0x4, fixed_abs, tag = 'smem constant byte address 0x4 - core index']
  #allocation1 [shape = 'u32[144,128]{1,0:T(1,128)}', space=vmem, size = 0x12000, scoped, tag = 'internal scratch']
  %s0 = inlined_call_operand.vmem [shape: f32[4], index: 0, kind: input, shape index: {}]
  %s1 = inlined_call_operand.hbm [shape: f32[1,1], index: 1, kind: output, shape index: {}]
  %s2 = sld [smem:[#allocation0]]
  $region18: #{_awl_call.1} parent=0
    _
  %s4 = ssub.s32 1, %s2
  %s5 = scalar_select 0, %s4, %s2
  $region1: #{_awl_call.1} parent=0
    #allocation2 [shape = 'u8[512]{0}', space=smem, size = 0x200, scoped, tag = 'input window, operand 0, single buffered']
    #allocation3 [shape = 's32[1]{0}', space=sflag, size = 0x4, scoped, tag = 'scoped memory for _awl_call.1']
    #allocation4 [shape = 's32[1]{0}', space=sflag, size = 0x4, scoped, tag = 'scoped memory for _awl_call.1']
    #allocation5 [shape = 'u8[512]{0}', space=vmem, size = 0x400, scoped, tag = 'output window, operand 0, single buffered']
    %6 = vsyncpa [#allocation4], 0
    %7 = vsyncpa [#allocation3], 0
    // Predicated region
    $region2: #{_awl_call.1} parent=1 // pred_check
      _
    $region3: #{_awl_call.1} parent=1 // pred_check_branch
      %9 = sbr.rel (0) target = $region5
    $region4: #{_awl_call.1} parent=1 // pred_region
      %s11 = ssub.s32 16, 16
      %12 = vsyncadd [#allocation4], %s11
      %s14 = sshll.u32 %s0, 4
      %s15 = int_to_ptr.vmem [resolvable:$true] %s14
      %17 = dma.vmem_to_smem %s15, 16, [#allocation2], [#allocation4]
    $region5: #{_awl_call.1} parent=1 // pred_fallthru
      _
    // Predicated region
    $region6: #{_awl_call.1} parent=1 // pred_check
      _
    $region7: #{_awl_call.1} parent=1 // pred_check_branch
      %19 = sbr.rel (0) target = $region9
    $region8: #{_awl_call.1} parent=1 // pred_region
      %20 = dma.done [#allocation4], 16
    $region9: #{_awl_call.1} parent=1 // pred_fallthru
      _
    %21 = sfence
    %s22 = sld [smem:[#allocation2]]
    %v23 = vstv %s22
    %s24 = sld [smem:[#allocation2 + $0x1]]
    %v25 = vstv %s24
    %s26 = sld [smem:[#allocation2 + $0x2]]
    %v27 = vstv %s26
    %s28 = sld [smem:[#allocation2 + $0x3]]
    %v29 = vstv %s28
    %v30 = vmul.f32 %v23, %v23
    %v31 = vmul.f32 %v25, %v25
    %v32 = vrcp.pop %v30
    %v33 = vmul.f32 0.5, %v32
    %v34 = vmul.f32 %v27, %v33
    %v35 = vadd.f32 %v30, 1.0
    %v36 = vlog2.pop %v35
    %v37 = vmul.f32 %v36, 0.6931472
    %v38 = vadd.f32 %v34, %v37
    %v39 = vrcp.pop %v31
    %v40 = vmul.f32 0.5, %v39
    %v41 = vmul.f32 %v29, %v40
    %v42 = vadd.f32 %v31, 1.0
    %v43 = vlog2.pop %v42
    %v44 = vmul.f32 %v43, 0.6931472
    %v45 = vadd.f32 %v41, %v44
    %v46 = vadd.f32 %v38, %v45
    %vm47 = vcmask 0
    %48 = vst.msk [vmem:[#allocation5] sm:$0x1] %vm47, %v46
    // Predicated region
    $region10: #{_awl_call.1} parent=1 // pred_check
      _
    $region11: #{_awl_call.1} parent=1 // pred_check_branch
      %50 = sbr.rel (0) target = $region13
    $region12: #{_awl_call.1} parent=1 // pred_region
      %s52 = ssub.s32 16, 16
      %53 = vsyncadd [#allocation3], %s52
      %s55 = sshll.u32 [#allocation5], 4
      %s56 = int_to_ptr.vmem [resolvable:$true] %s55
      %58 = dma.vmem_to_hbm [thread:$0]  %s56, 16, %s1, [#allocation3]
    $region13: #{_awl_call.1} parent=1 // pred_fallthru
      _
    // Predicated region
    $region14: #{_awl_call.1} parent=1 // pred_check
      _
    $region15: #{_awl_call.1} parent=1 // pred_check_branch
      %60 = sbr.rel (0) target = $region17
    $region16: #{_awl_call.1} parent=1 // pred_region
      %61 = dma.done [#allocation3], 16
    $region17: #{_awl_call.1} parent=1 // pred_fallthru
      _
    %62 = vsyncpa [#allocation3], 1
    %63 = vsyncpa [#allocation4], 1

</llo_original>
